<compile_context>
chip_gen: v5e
topology: v5e:2x2
jax: 0.10.0
libtpu: 0.0.40
codegen_flags: <defaults>
</compile_context>

<pallas_src>
import functools

import jax
import jax.numpy as jnp
from jax import lax
from jax.experimental import pallas as pl
from jax.experimental.pallas import tpu as pltpu


def _round_up(x, m):
    return ((x + m - 1) // m) * m


def _mxu_cross(r, c):
    """r (tm, D) x c (tn, D)^T -> (tm, tn) f32 on the MXU."""
    dn = (((1,), (1,)), ((), ()))
    if r.dtype == jnp.bfloat16:
        # Exact for bf16 operands with an f32 accumulator — single MXU pass.
        return lax.dot_general(r, c, dn, preferred_element_type=jnp.float32)
    # f32 path: manual bf16x3 (equivalent to Precision.HIGH, 3 passes). The
    # Mosaic dot_general lowering only supports DEFAULT / HIGHEST, and HIGHEST
    # would be 6 passes — 2x the MXU work for no needed accuracy here.
    r = r.astype(jnp.float32)
    c = c.astype(jnp.float32)
    rh = r.astype(jnp.bfloat16)
    rl = (r - rh.astype(jnp.float32)).astype(jnp.bfloat16)
    ch = c.astype(jnp.bfloat16)
    cl = (c - ch.astype(jnp.float32)).astype(jnp.bfloat16)
    out = lax.dot_general(rh, ch, dn, preferred_element_type=jnp.float32)
    out = out + lax.dot_general(rh, cl, dn, preferred_element_type=jnp.float32)
    out = out + lax.dot_general(rl, ch, dn, preferred_element_type=jnp.float32)
    return out


def _rowsum_kernel(rows_ref, cols_ref, rn_ref, cn_ref, out_ref, *, inv_temp):
    i = pl.program_id(0)          # row-tile index  ("parallel")
    j = pl.program_id(1)          # col-tile index  ("arbitrary" reduction)
    tm = rows_ref.shape[0]
    tn = cols_ref.shape[0]

    @pl.when(j == 0)
    def _init():
        out_ref[...] = jnp.zeros_like(out_ref)

    cross = _mxu_cross(rows_ref[...], cols_ref[...])        # (tm, tn) f32

    rn = rn_ref[...]                                        # (tm, 1) f32, precomputed
    cn = cn_ref[...]                                        # (1, tn) f32, precomputed
    d2 = jnp.maximum(rn + cn - 2.0 * cross, 0.0)

    # Self-distance is exactly 0 so the diagonal sim == exp(0) == 1 (the diag
    # IS part of the reference denominator).  Broadcast iotas only — no
    # materialized (tm, tn) int32 index tiles.
    row_ids = i * tm + lax.broadcasted_iota(jnp.int32, (tm, 1), 0)
    col_ids = j * tn + lax.broadcasted_iota(jnp.int32, (1, tn), 1)
    d2 = jnp.where(row_ids == col_ids, 0.0, d2)

    sim = jnp.exp(-jnp.sqrt(d2) * jnp.float32(inv_temp))    # (tm, tn); EUP path

    # Lane-wise accumulation: one VPU add per 128-lane slab (tn is always a
    # multiple of 128).  The single cross-lane reduce happens in the wrapper.
    acc = sim[:, 0:128]
    for k in range(1, tn // 128):
        acc = acc + sim[:, k * 128:(k + 1) * 128]
    out_ref[...] += acc


def _choose_tiling(n2, d, itemsize):
    """Pick (tm, tn, n2p, vmem_limit_bytes). tm, tn are multiples of 128."""
    try:
        vmem_cap = int(pltpu.get_tpu_info().vmem_capacity_bytes)
    except Exception:
        vmem_cap = 64 * 1024 * 1024          # conservative: v7x per-TensorCore VMEM
    vmem_limit = min((vmem_cap * 3) // 4, 96 * 1024 * 1024)   # 48 MiB v7x, 96 MiB v5e/v6e
    budget = vmem_limit - (8 << 20)          # headroom for Mosaic-internal scratch

    def fits(tm, tn):
        inputs = 2 * (tm + tn) * d * itemsize       # row/col tiles, double-buffered
        norms = 2 * (tm + 2 * tn) * 4               # (tm,1) + (1,tn) f32 norm tiles
        interm = 6 * tm * tn * 4                    # cross / d2 / sim f32 temporaries
        out = 2 * tm * 128 * 4                      # resident lane accumulator block
        return inputs + norms + interm + out <= budget

    n2a = _round_up(n2, 128)
    want_two_row_tiles = (n2a // 128) >= 2          # lets v7x use both TensorCores

    # Config A: whole column operand resident in VMEM (loaded once), grid (R, 1).
    # Only tile sizes that divide the 128-aligned problem, so padding never
    # inflates the O(N^2) work.
    for tm in (512, 384, 256, 128):
        if n2a % tm:
            continue
        if want_two_row_tiles and n2a // tm < 2:
            continue
        if fits(tm, n2a):
            return tm, n2a, n2a, vmem_limit

    # Config B: square (t, t) tiles, columns streamed per row tile.
    t, best = 128, 128
    while t <= min(512, n2a):
        if n2a % t == 0 and fits(t, t):
            best = t
        t += 128
    if want_two_row_tiles and n2a // best < 2:
        t, best2 = 128, 128
        while t <= n2a // 2:
            if n2a % t == 0 and fits(t, t):
                best2 = t
            t += 128
        best = best2
    return best, best, n2a, vmem_limit


def infonce_loss_euclidean(z_i, z_j, temperature):
    """Pallas TPU implementation of InfoNCELossEuclidean.forward."""
    if z_i.ndim != 2 or z_i.shape != z_j.shape:
        raise ValueError("z_i / z_j must be 2-D with identical shapes")
    b, d = z_i.shape
    n2 = 2 * b
    inv_t = 1.0 / float(temperature)

    reps = jnp.concatenate([z_i, z_j], axis=0)              # (2B, D), native dtype

    # Exact O(B*D) numerator: nom[r] = exp(-||z_i[r] - z_j[r]|| / T), symmetric.
    diff = z_i.astype(jnp.float32) - z_j.astype(jnp.float32)
    nom_half = jnp.exp(-jnp.sqrt(jnp.sum(diff * diff, axis=1)) * inv_t)
    nom = jnp.concatenate([nom_half, nom_half], axis=0)     # (2B,)

    # Squared norms (f32), hoisted out of the kernel grid.
    reps32 = reps.astype(jnp.float32)
    norms = jnp.sum(reps32 * reps32, axis=1)                # (2B,)

    tm, tn, n2p, vmem_limit = _choose_tiling(n2, d, reps.dtype.itemsize)
    n_pad = n2p - n2

    reps_p = jnp.pad(reps, ((0, n_pad), (0, 0))) if n_pad else reps
    norms_p = jnp.pad(norms, (0, n_pad)) if n_pad else norms
    row_norms = norms_p[:, None]                            # (n2p, 1)
    col_norms = norms_p[None, :]                            # (1, n2p)

    grid = (n2p // tm, n2p // tn)
    kernel = functools.partial(_rowsum_kernel, inv_temp=inv_t)
    lane_sums = pl.pallas_call(
        kernel,
        out_shape=jax.ShapeDtypeStruct((n2p, 128), jnp.float32),
        grid_spec=pltpu.PrefetchScalarGridSpec(
            num_scalar_prefetch=0,
            grid=grid,
            in_specs=[
                pl.BlockSpec((tm, d), lambda i, j: (i, 0)),   # row tile (native dtype)
                pl.BlockSpec((tn, d), lambda i, j: (j, 0)),   # col tile (resident if tn==n2p)
                pl.BlockSpec((tm, 1), lambda i, j: (i, 0)),   # row squared norms
                pl.BlockSpec((1, tn), lambda i, j: (0, j)),   # col squared norms
            ],
            out_specs=pl.BlockSpec((tm, 128), lambda i, j: (i, 0)),
        ),
        compiler_params=pltpu.CompilerParams(
            dimension_semantics=("parallel", "arbitrary"),
            vmem_limit_bytes=int(vmem_limit)),
    )(reps_p, reps_p, row_norms, col_norms)

    # Total row sum over all n2p columns; drop padded columns and the positive.
    row_total = jnp.sum(lane_sums, axis=1)[:n2]
    if n_pad:
        # Padded columns are zero vectors: sim(row r, pad) == exp(-||r|| / T).
        row_total = row_total - n_pad * jnp.exp(-jnp.sqrt(norms) * inv_t)
    den = row_total - nom           # diagonal (== 1) stays in, as in the reference
    return -jnp.mean(jnp.log(nom) - jnp.log(den))


def _infonce_ref(z_i, z_j, temperature):
    """Pure-JAX reference mirroring the PyTorch module."""
    b = z_i.shape[0]
    reps = jnp.concatenate([z_i, z_j], axis=0).astype(jnp.float32)
    diff = reps[:, None, :] - reps[None, :, :]
    dist = jnp.sqrt(jnp.sum(diff * diff, axis=-1))
    sim = jnp.exp(-dist / temperature)
    n1 = jnp.arange(b)
    n2 = jnp.arange(b, 2 * b)
    nominator = jnp.concatenate([sim[n1, n2], sim[n2, n1]])
    mask = (jnp.zeros((2 * b, 2 * b), dtype=bool)
            .at[n1, n2].set(True).at[n2, n1].set(True))
    denominator = jnp.sum(jnp.where(mask, 0.0, sim), axis=1)
    return -jnp.mean(jnp.log(nominator / denominator))


if __name__ == "__main__":
    key = jax.random.PRNGKey(0)
    k1, k2, k3, k4, k5, k6 = jax.random.split(key, 6)
    temperature = 0.5

    # Case 1: f32, batch=8, hidden=32.
    B, D = 8, 32
    z_i = jax.random.normal(k1, (B, D), dtype=jnp.float32)
    z_j = z_i + 0.1 * jax.random.normal(k2, (B, D), dtype=jnp.float32)
    out = jax.block_until_ready(infonce_loss_euclidean(z_i, z_j, temperature))
    ref = _infonce_ref(z_i, z_j, temperature)
    assert jnp.allclose(out, ref, rtol=2e-3, atol=2e-4), (out, ref)

    # Case 2: f32, batch=6, hidden=20 (exercises the padding correction).
    B2, D2 = 6, 20
    z_i2 = jax.random.normal(k3, (B2, D2), dtype=jnp.float32)
    z_j2 = z_i2 + 0.2 * jax.random.normal(k4, (B2, D2), dtype=jnp.float32)
    out2 = jax.block_until_ready(infonce_loss_euclidean(z_i2, z_j2, temperature))
    ref2 = _infonce_ref(z_i2, z_j2, temperature)
    assert jnp.allclose(out2, ref2, rtol=2e-3, atol=2e-4), (out2, ref2)

    # Case 3: bf16 inputs (native single-pass MXU path).
    B3, D3 = 8, 32
    z_i3 = jax.random.normal(k5, (B3, D3), dtype=jnp.float32).astype(jnp.bfloat16)
    z_j3 = (z_i3.astype(jnp.float32)
            + 0.15 * jax.random.normal(k6, (B3, D3), dtype=jnp.float32)
            ).astype(jnp.bfloat16)
    out3 = jax.block_until_ready(infonce_loss_euclidean(z_i3, z_j3, temperature))
    ref3 = _infonce_ref(z_i3, z_j3, temperature)
    assert jnp.allclose(out3, ref3, rtol=1e-2, atol=1e-3), (out3, ref3)

    print("KERNEL_OK")
</pallas_src>

<mosaic_0001>
module attributes {stable_mosaic.version = 11 : i64} {
  func.func @_rowsum_kernel(%arg0: i32, %arg1: i32, %arg2: memref<128x32xf32, #tpu.memory_space<vmem>>, %arg3: memref<128x32xf32, #tpu.memory_space<vmem>>, %arg4: memref<128x1xf32, #tpu.memory_space<vmem>>, %arg5: memref<1x128xf32, #tpu.memory_space<vmem>>, %arg6: memref<128x128xf32, #tpu.memory_space<vmem>>) attributes {dimension_semantics = [#tpu.dimension_semantics<parallel>, #tpu.dimension_semantics<arbitrary>], iteration_bounds = array<i64: 1, 1>, scalar_prefetch = 0 : i64, scratch_operands = 0 : i64, tpu.core_type = #tpu.core_type<tc>, window_params = [{transform_indices = @transform_0, window_bounds = array<i64: 128, 32>}, {transform_indices = @transform_1, window_bounds = array<i64: 128, 32>}, {transform_indices = @transform_2, window_bounds = array<i64: 128, 1>}, {transform_indices = @transform_3, window_bounds = array<i64: 1, 128>}, {transform_indices = @transform_4, window_bounds = array<i64: 128, 128>}]} {
    %c0_i32 = arith.constant 0 : i32
    %0 = arith.cmpi eq, %arg1, %c0_i32 : i32
    %1 = arith.extui %0 : i1 to i32
    %c0_i32_0 = arith.constant 0 : i32
    %2 = arith.cmpi ne, %1, %c0_i32_0 : i32
    scf.if %2 {
      %cst_20 = arith.constant 0.000000e+00 : f32
      %50 = vector.broadcast %cst_20 : f32 to vector<128x128xf32>
      %c0_21 = arith.constant 0 : index
      %c0_22 = arith.constant 0 : index
      %51 = vector.load %arg6[%c0_21, %c0_22] : memref<128x128xf32, #tpu.memory_space<vmem>>, vector<128x128xf32>
      tpu.vector_store %arg6[%c0_21, %c0_22], %50 {strides = array<i32>} : memref<128x128xf32, #tpu.memory_space<vmem>>, vector<128x128xf32>,
    } else {
    }
    %c0 = arith.constant 0 : index
    %c0_1 = arith.constant 0 : index
    %3 = vector.load %arg2[%c0, %c0_1] : memref<128x32xf32, #tpu.memory_space<vmem>>, vector<128x32xf32>
    %c0_2 = arith.constant 0 : index
    %c0_3 = arith.constant 0 : index
    %4 = vector.load %arg3[%c0_2, %c0_3] : memref<128x32xf32, #tpu.memory_space<vmem>>, vector<128x32xf32>
    %5 = arith.truncf %3 : vector<128x32xf32> to vector<128x32xbf16>
    %6 = arith.extf %5 : vector<128x32xbf16> to vector<128x32xf32>
    %7 = arith.subf %3, %6 : vector<128x32xf32>
    %8 = arith.truncf %7 : vector<128x32xf32> to vector<128x32xbf16>
    %9 = arith.truncf %4 : vector<128x32xf32> to vector<128x32xbf16>
    %10 = arith.extf %9 : vector<128x32xbf16> to vector<128x32xf32>
    %11 = arith.subf %4, %10 : vector<128x32xf32>
    %12 = arith.truncf %11 : vector<128x32xf32> to vector<128x32xbf16>
    %cst = arith.constant dense<0.000000e+00> : vector<128x128xf32>
    %13 = tpu.matmul %5, %9, %cst {dimension_numbers = #tpu.dot_dimension_numbers<[1], [1], [0], [0], [0, 0, 1, 0], [], []>} : vector<128x32xbf16>, vector<128x32xbf16>, vector<128x128xf32> -> vector<128x128xf32>
    %cst_4 = arith.constant dense<0.000000e+00> : vector<128x128xf32>
    %14 = tpu.matmul %5, %12, %cst_4 {dimension_numbers = #tpu.dot_dimension_numbers<[1], [1], [0], [0], [0, 0, 1, 0], [], []>} : vector<128x32xbf16>, vector<128x32xbf16>, vector<128x128xf32> -> vector<128x128xf32>
    %15 = arith.addf %13, %14 : vector<128x128xf32>
    %cst_5 = arith.constant dense<0.000000e+00> : vector<128x128xf32>
    %16 = tpu.matmul %8, %9, %cst_5 {dimension_numbers = #tpu.dot_dimension_numbers<[1], [1], [0], [0], [0, 0, 1, 0], [], []>} : vector<128x32xbf16>, vector<128x32xbf16>, vector<128x128xf32> -> vector<128x128xf32>
    %17 = arith.addf %15, %16 : vector<128x128xf32>
    %c0_6 = arith.constant 0 : index
    %c0_7 = arith.constant 0 : index
    %18 = vector.load %arg4[%c0_6, %c0_7] : memref<128x1xf32, #tpu.memory_space<vmem>>, vector<128x1xf32>
    %c0_8 = arith.constant 0 : index
    %c0_9 = arith.constant 0 : index
    %19 = vector.load %arg5[%c0_8, %c0_9] : memref<1x128xf32, #tpu.memory_space<vmem>>, vector<1x128xf32>
    %20 = vector.broadcast %18 : vector<128x1xf32> to vector<128x128xf32>
    %21 = vector.broadcast %19 : vector<1x128xf32> to vector<128x128xf32>
    %22 = arith.addf %20, %21 : vector<128x128xf32>
    %cst_10 = arith.constant 2.000000e+00 : f32
    %23 = vector.broadcast %cst_10 : f32 to vector<128x128xf32>
    %24 = arith.mulf %23, %17 : vector<128x128xf32>
    %25 = arith.subf %22, %24 : vector<128x128xf32>
    %cst_11 = arith.constant 0.000000e+00 : f32
    %26 = vector.broadcast %cst_11 : f32 to vector<128x128xf32>
    %27 = arith.maximumf %25, %26 : vector<128x128xf32>
    %c128_i32 = arith.constant 128 : i32
    %28 = arith.muli %arg0, %c128_i32 : i32
    %29 = tpu.iota {dimensions = array<i32: 0>} : vector<128x1xi32>
    %30 = vector.broadcast %28 : i32 to vector<128x1xi32>
    %31 = arith.addi %30, %29 : vector<128x1xi32>
    %c128_i32_12 = arith.constant 128 : i32
    %32 = arith.muli %arg1, %c128_i32_12 : i32
    %33 = tpu.iota {dimensions = array<i32: 1>} : vector<1x128xi32>
    %34 = vector.broadcast %32 : i32 to vector<1x128xi32>
    %35 = arith.addi %34, %33 : vector<1x128xi32>
    %36 = vector.broadcast %31 : vector<128x1xi32> to vector<128x128xi32>
    %37 = vector.broadcast %35 : vector<1x128xi32> to vector<128x128xi32>
    %38 = arith.cmpi eq, %36, %37 : vector<128x128xi32>
    %cst_13 = arith.constant 0.000000e+00 : f32
    %39 = vector.broadcast %cst_13 : f32 to vector<128x128xf32>
    %40 = arith.select %38, %39, %27 : vector<128x128xi1>, vector<128x128xf32>
    %41 = math.sqrt %40 : vector<128x128xf32>
    %cst_14 = arith.constant 0.000000e+00 : f32
    %42 = vector.broadcast %cst_14 : f32 to vector<128x128xf32>
    %43 = arith.subf %42, %41 : vector<128x128xf32>
    %cst_15 = arith.constant 2.000000e+00 : f32
    %44 = vector.broadcast %cst_15 : f32 to vector<128x128xf32>
    %45 = arith.mulf %43, %44 : vector<128x128xf32>
    %46 = math.exp %45 : vector<128x128xf32>
    %c0_16 = arith.constant 0 : index
    %c0_17 = arith.constant 0 : index
    %47 = vector.load %arg6[%c0_16, %c0_17] : memref<128x128xf32, #tpu.memory_space<vmem>>, vector<128x128xf32>
    %48 = arith.addf %47, %46 : vector<128x128xf32>
    %c0_18 = arith.constant 0 : index
    %c0_19 = arith.constant 0 : index
    %49 = vector.load %arg6[%c0_18, %c0_19] : memref<128x128xf32, #tpu.memory_space<vmem>>, vector<128x128xf32>
    tpu.vector_store %arg6[%c0_18, %c0_19], %48 {strides = array<i32>} : memref<128x128xf32, #tpu.memory_space<vmem>>, vector<128x128xf32>,
    return
  }
  func.func @transform_0(%arg0: i32, %arg1: i32) -> (i32, i32) {
    %c0_i32 = arith.constant 0 : i32
    %c0_i32_0 = arith.constant 0 : i32
    return %arg0, %c0_i32 : i32, i32
  }
  func.func @transform_1(%arg0: i32, %arg1: i32) -> (i32, i32) {
    %c0_i32 = arith.constant 0 : i32
    %c0_i32_0 = arith.constant 0 : i32
    return %arg1, %c0_i32 : i32, i32
  }
  func.func @transform_2(%arg0: i32, %arg1: i32) -> (i32, i32) {
    %c0_i32 = arith.constant 0 : i32
    %c0_i32_0 = arith.constant 0 : i32
    return %arg0, %c0_i32 : i32, i32
  }
  func.func @transform_3(%arg0: i32, %arg1: i32) -> (i32, i32) {
    %c0_i32 = arith.constant 0 : i32
    %c0_i32_0 = arith.constant 0 : i32
    return %c0_i32, %arg1 : i32, i32
  }
  func.func @transform_4(%arg0: i32, %arg1: i32) -> (i32, i32) {
    %c0_i32 = arith.constant 0 : i32
    %c0_i32_0 = arith.constant 0 : i32
    return %arg0, %c0_i32 : i32, i32
  }
}

</mosaic_0001>

<llo_original>
// kernel: tpu_custom_call.1
$region0: #{tpu_custom_call.1}
  #allocation0 [shape = 'u32[]', space=smem, size = 0x4, offset = 0x4, fixed_abs, tag = 'smem constant byte address 0x4 - core index']
  #allocation1 [shape = 'u32[72,128]{1,0:T(1,128)}', space=vmem, size = 0x9000, scoped, tag = 'internal scratch']
  %s0 = inlined_call_operand.vmem [shape: f32[128,32], index: 0, kind: input, shape index: {}]
  %s1 = inlined_call_operand.vmem [shape: f32[128,32], index: 1, kind: input, shape index: {}]
  %s2 = inlined_call_operand.vmem [shape: f32[128,1], index: 2, kind: input, shape index: {}]
  %s3 = inlined_call_operand.vmem [shape: f32[1,128], index: 3, kind: input, shape index: {}]
  %s4 = inlined_call_operand.hbm [shape: f32[128,128], index: 4, kind: output, shape index: {}]
  %s5 = sld [smem:[#allocation0]]
  $region30: #{tpu_custom_call.1} parent=0
    _
  %s7 = ssub.s32 1, %s5
  %s8 = scalar_select 0, %s7, %s5
  $region1: #{tpu_custom_call.1} parent=0
    #allocation2 [shape = 'u8[65536]{0}', space=vmem, size = 0x10000, scoped, tag = 'output window, operand 0, single buffered']
    #allocation3 [shape = 's32[1]{0}', space=sflag, size = 0x4, scoped, tag = 'scoped memory for tpu_custom_call.1']
    %9 = vsyncpa [#allocation3], 0
    // Predicated region
    $region2: #{tpu_custom_call.1} parent=1 // pred_check
      _
    $region3: #{tpu_custom_call.1} parent=1 // pred_check_branch
      %11 = sbr.rel (0) target = $region5
    $region4: #{tpu_custom_call.1} parent=1 // pred_region
      _
    $region5: #{tpu_custom_call.1} parent=1 // pred_fallthru
      _
    // Predicated region
    $region6: #{tpu_custom_call.1} parent=1 // pred_check
      _
    $region7: #{tpu_custom_call.1} parent=1 // pred_check_branch
      %13 = sbr.rel (0) target = $region9
    $region8: #{tpu_custom_call.1} parent=1 // pred_region
      _
    $region9: #{tpu_custom_call.1} parent=1 // pred_fallthru
      _
    // Predicated region
    $region10: #{tpu_custom_call.1} parent=1 // pred_check
      _
    $region11: #{tpu_custom_call.1} parent=1 // pred_check_branch
      %15 = sbr.rel (0) target = $region13
    $region12: #{tpu_custom_call.1} parent=1 // pred_region
      _
    $region13: #{tpu_custom_call.1} parent=1 // pred_fallthru
      _
    // Predicated region
    $region14: #{tpu_custom_call.1} parent=1 // pred_check
      _
    $region15: #{tpu_custom_call.1} parent=1 // pred_check_branch
      %17 = sbr.rel (0) target = $region17
    $region16: #{tpu_custom_call.1} parent=1 // pred_region
      _
    $region17: #{tpu_custom_call.1} parent=1 // pred_fallthru
      _
    %p18 = scmp.eq.s32.totalorder 0, 0
    // Predicated region
    $region18: #{tpu_custom_call.1} parent=1 // pred_check
      %p19 = pneg %p18
    $region19: #{tpu_custom_call.1} parent=1 // pred_check_branch
      %21 = sbr.rel (%p19) target = $region21
    $region20: #{tpu_custom_call.1} parent=1 // pred_region
      %22 = vst [vmem:[#allocation2] sm:$0xff] 0.0
      %23 = vst [vmem:[#allocation2 + $0x8] sm:$0xff] 0.0
      %24 = vst [vmem:[#allocation2 + $0x10] sm:$0xff] 0.0
      %25 = vst [vmem:[#allocation2 + $0x18] sm:$0xff] 0.0
      %26 = vst [vmem:[#allocation2 + $0x20] sm:$0xff] 0.0
      %27 = vst [vmem:[#allocation2 + $0x28] sm:$0xff] 0.0
      %28 = vst [vmem:[#allocation2 + $0x30] sm:$0xff] 0.0
      %29 = vst [vmem:[#allocation2 + $0x38] sm:$0xff] 0.0
      %30 = vst [vmem:[#allocation2 + $0x40] sm:$0xff] 0.0
      %31 = vst [vmem:[#allocation2 + $0x48] sm:$0xff] 0.0
      %32 = vst [vmem:[#allocation2 + $0x50] sm:$0xff] 0.0
      %33 = vst [vmem:[#allocation2 + $0x58] sm:$0xff] 0.0
      %34 = vst [vmem:[#allocation2 + $0x60] sm:$0xff] 0.0
      %35 = vst [vmem:[#allocation2 + $0x68] sm:$0xff] 0.0
      %36 = vst [vmem:[#allocation2 + $0x70] sm:$0xff] 0.0
      %37 = vst [vmem:[#allocation2 + $0x78] sm:$0xff] 0.0
    $region21: #{tpu_custom_call.1} parent=1 // pred_fallthru
      _
    %v38 = vld [vmem:[%s0] sm:$0xff]
    %v39 = vld [vmem:[%s0 + $0x8] sm:$0xff]
    %v40 = vld [vmem:[%s0 + $0x10] sm:$0xff]
    %v41 = vld [vmem:[%s0 + $0x18] sm:$0xff]
    %v42 = vld [vmem:[%s0 + $0x20] sm:$0xff]
    %v43 = vld [vmem:[%s0 + $0x28] sm:$0xff]
    %v44 = vld [vmem:[%s0 + $0x30] sm:$0xff]
    %v45 = vld [vmem:[%s0 + $0x38] sm:$0xff]
    %v46 = vld [vmem:[%s0 + $0x40] sm:$0xff]
    %v47 = vld [vmem:[%s0 + $0x48] sm:$0xff]
    %v48 = vld [vmem:[%s0 + $0x50] sm:$0xff]
    %v49 = vld [vmem:[%s0 + $0x58] sm:$0xff]
    %v50 = vld [vmem:[%s0 + $0x60] sm:$0xff]
    %v51 = vld [vmem:[%s0 + $0x68] sm:$0xff]
    %v52 = vld [vmem:[%s0 + $0x70] sm:$0xff]
    %v53 = vld [vmem:[%s0 + $0x78] sm:$0xff]
    %v54 = vld [vmem:[%s1] sm:$0xff]
    %v55 = vld [vmem:[%s1 + $0x8] sm:$0xff]
    %v56 = vld [vmem:[%s1 + $0x10] sm:$0xff]
    %v57 = vld [vmem:[%s1 + $0x18] sm:$0xff]
    %v58 = vld [vmem:[%s1 + $0x20] sm:$0xff]
    %v59 = vld [vmem:[%s1 + $0x28] sm:$0xff]
    %v60 = vld [vmem:[%s1 + $0x30] sm:$0xff]
    %v61 = vld [vmem:[%s1 + $0x38] sm:$0xff]
    %v62 = vld [vmem:[%s1 + $0x40] sm:$0xff]
    %v63 = vld [vmem:[%s1 + $0x48] sm:$0xff]
    %v64 = vld [vmem:[%s1 + $0x50] sm:$0xff]
    %v65 = vld [vmem:[%s1 + $0x58] sm:$0xff]
    %v66 = vld [vmem:[%s1 + $0x60] sm:$0xff]
    %v67 = vld [vmem:[%s1 + $0x68] sm:$0xff]
    %v68 = vld [vmem:[%s1 + $0x70] sm:$0xff]
    %v69 = vld [vmem:[%s1 + $0x78] sm:$0xff]
    %v70 = vpack.c.bf16 %v38, %v38
    %v71 = vpack.c.bf16 %v39, %v39
    %v72 = vpack.c.bf16 %v40, %v40
    %v73 = vpack.c.bf16 %v41, %v41
    %v74 = vpack.c.bf16 %v42, %v42
    %v75 = vpack.c.bf16 %v43, %v43
    %v76 = vpack.c.bf16 %v44, %v44
    %v77 = vpack.c.bf16 %v45, %v45
    %v78 = vpack.c.bf16 %v46, %v46
    %v79 = vpack.c.bf16 %v47, %v47
    %v80 = vpack.c.bf16 %v48, %v48
    %v81 = vpack.c.bf16 %v49, %v49
    %v82 = vpack.c.bf16 %v50, %v50
    %v83 = vpack.c.bf16 %v51, %v51
    %v84 = vpack.c.bf16 %v52, %v52
    %v85 = vpack.c.bf16 %v53, %v53
    %v86 = vunpack.c.l.bf16 %v70
    %v87 = vunpack.c.l.bf16 %v71
    %v88 = vunpack.c.l.bf16 %v72
    %v89 = vunpack.c.l.bf16 %v73
    %v90 = vunpack.c.l.bf16 %v74
    %v91 = vunpack.c.l.bf16 %v75
    %v92 = vunpack.c.l.bf16 %v76
    %v93 = vunpack.c.l.bf16 %v77
    %v94 = vunpack.c.l.bf16 %v78
    %v95 = vunpack.c.l.bf16 %v79
    %v96 = vunpack.c.l.bf16 %v80
    %v97 = vunpack.c.l.bf16 %v81
    %v98 = vunpack.c.l.bf16 %v82
    %v99 = vunpack.c.l.bf16 %v83
    %v100 = vunpack.c.l.bf16 %v84
    %v101 = vunpack.c.l.bf16 %v85
    %v102 = vsub.f32 %v38, %v86
    %v103 = vsub.f32 %v39, %v87
    %v104 = vsub.f32 %v40, %v88
    %v105 = vsub.f32 %v41, %v89
    %v106 = vsub.f32 %v42, %v90
    %v107 = vsub.f32 %v43, %v91
    %v108 = vsub.f32 %v44, %v92
    %v109 = vsub.f32 %v45, %v93
    %v110 = vsub.f32 %v46, %v94
    %v111 = vsub.f32 %v47, %v95
    %v112 = vsub.f32 %v48, %v96
    %v113 = vsub.f32 %v49, %v97
    %v114 = vsub.f32 %v50, %v98
    %v115 = vsub.f32 %v51, %v99
    %v116 = vsub.f32 %v52, %v100
    %v117 = vsub.f32 %v53, %v101
    %v118 = vpack.c.bf16 %v103, %v102
    %v119 = vpack.c.bf16 %v105, %v104
    %v120 = vpack.c.bf16 %v107, %v106
    %v121 = vpack.c.bf16 %v109, %v108
    %v122 = vpack.c.bf16 %v111, %v110
    %v123 = vpack.c.bf16 %v113, %v112
    %v124 = vpack.c.bf16 %v115, %v114
    %v125 = vpack.c.bf16 %v117, %v116
    %v126 = vpack.c.bf16 %v54, %v54
    %v127 = vpack.c.bf16 %v55, %v55
    %v128 = vpack.c.bf16 %v56, %v56
    %v129 = vpack.c.bf16 %v57, %v57
    %v130 = vpack.c.bf16 %v58, %v58
    %v131 = vpack.c.bf16 %v59, %v59
    %v132 = vpack.c.bf16 %v60, %v60
    %v133 = vpack.c.bf16 %v61, %v61
    %v134 = vpack.c.bf16 %v62, %v62
    %v135 = vpack.c.bf16 %v63, %v63
    %v136 = vpack.c.bf16 %v64, %v64
    %v137 = vpack.c.bf16 %v65, %v65
    %v138 = vpack.c.bf16 %v66, %v66
    %v139 = vpack.c.bf16 %v67, %v67
    %v140 = vpack.c.bf16 %v68, %v68
    %v141 = vpack.c.bf16 %v69, %v69
    %v142 = vunpack.c.l.bf16 %v126
    %v143 = vunpack.c.l.bf16 %v127
    %v144 = vunpack.c.l.bf16 %v128
    %v145 = vunpack.c.l.bf16 %v129
    %v146 = vunpack.c.l.bf16 %v130
    %v147 = vunpack.c.l.bf16 %v131
    %v148 = vunpack.c.l.bf16 %v132
    %v149 = vunpack.c.l.bf16 %v133
    %v150 = vunpack.c.l.bf16 %v134
    %v151 = vunpack.c.l.bf16 %v135
    %v152 = vunpack.c.l.bf16 %v136
    %v153 = vunpack.c.l.bf16 %v137
    %v154 = vunpack.c.l.bf16 %v138
    %v155 = vunpack.c.l.bf16 %v139
    %v156 = vunpack.c.l.bf16 %v140
    %v157 = vunpack.c.l.bf16 %v141
    %v158 = vsub.f32 %v54, %v142
    %v159 = vsub.f32 %v55, %v143
    %v160 = vsub.f32 %v56, %v144
    %v161 = vsub.f32 %v57, %v145
    %v162 = vsub.f32 %v58, %v146
    %v163 = vsub.f32 %v59, %v147
    %v164 = vsub.f32 %v60, %v148
    %v165 = vsub.f32 %v61, %v149
    %v166 = vsub.f32 %v62, %v150
    %v167 = vsub.f32 %v63, %v151
    %v168 = vsub.f32 %v64, %v152
    %v169 = vsub.f32 %v65, %v153
    %v170 = vsub.f32 %v66, %v154
    %v171 = vsub.f32 %v67, %v155
    %v172 = vsub.f32 %v68, %v156
    %v173 = vsub.f32 %v69, %v157
    %v174 = vpack.c.bf16 %v159, %v158
    %v175 = vpack.c.bf16 %v161, %v160
    %v176 = vpack.c.bf16 %v163, %v162
    %v177 = vpack.c.bf16 %v165, %v164
    %v178 = vpack.c.bf16 %v167, %v166
    %v179 = vpack.c.bf16 %v169, %v168
    %v180 = vpack.c.bf16 %v171, %v170
    %v181 = vpack.c.bf16 %v173, %v172
    %v198 = vunpack.c.l.b16 %v70
    %v199 = vunpack.c.l.b16 %v71
    %v200 = vunpack.c.l.b16 %v72
    %v201 = vunpack.c.l.b16 %v73
    %v202 = vunpack.c.l.b16 %v74
    %v203 = vunpack.c.l.b16 %v75
    %v204 = vunpack.c.l.b16 %v76
    %v205 = vunpack.c.l.b16 %v77
    %v206 = vunpack.c.l.b16 %v78
    %v207 = vunpack.c.l.b16 %v79
    %v208 = vunpack.c.l.b16 %v80
    %v209 = vunpack.c.l.b16 %v81
    %v210 = vunpack.c.l.b16 %v82
    %v211 = vunpack.c.l.b16 %v83
    %v212 = vunpack.c.l.b16 %v84
    %v213 = vunpack.c.l.b16 %v85
    %v214 = vpack.c.b16 %v199, %v198
    %v215 = vpack.c.b16 %v201, %v200
    %v216 = vpack.c.b16 %v203, %v202
    %v217 = vpack.c.b16 %v205, %v204
    %v218 = vpack.c.b16 %v207, %v206
    %v219 = vpack.c.b16 %v209, %v208
    %v220 = vpack.c.b16 %v211, %v210
    %v221 = vpack.c.b16 %v213, %v212
    %vm222 = vcmask 261120
    %v224 = vsel %vm222, %v214, 0
    %v227 = vsel %vm222, %v215, 0
    %v230 = vsel %vm222, %v216, 0
    %v233 = vsel %vm222, %v217, 0
    %v236 = vsel %vm222, %v218, 0
    %v239 = vsel %vm222, %v219, 0
    %v242 = vsel %vm222, %v220, 0
    %v245 = vsel %vm222, %v221, 0
    %v248 = vsel %vm222, %v174, 0
    %v251 = vsel %vm222, %v175, 0
    %v254 = vsel %vm222, %v176, 0
    %v257 = vsel %vm222, %v177, 0
    %v260 = vsel %vm222, %v178, 0
    %v263 = vsel %vm222, %v179, 0
    %v266 = vsel %vm222, %v180, 0
    %v269 = vsel %vm222, %v181, 0
    %271 = vmatpush.bf16.xpose.msra.mxu0 %v269
    %272 = vmatpush.bf16.xpose.msra.mxu0 %v266
    %273 = vmatpush.bf16.xpose.msra.mxu0 %v263
    %274 = vmatpush.bf16.xpose.msra.mxu0 %v260
    %275 = vmatpush.bf16.xpose.msra.mxu0 %v257
    %276 = vmatpush.bf16.xpose.msra.mxu0 %v254
    %277 = vmatpush.bf16.xpose.msra.mxu0 %v251
    %278 = vmatpush.bf16.xpose.msra.mxu0 %v248
    %279 = vmatmul.bf16.gmra.mxu0 %v224
    %v280 = vpop.f32.mrf.mxu0
    %v281 = vadd.f32 0.0, %v280
    %v282 = vpop.f32.mrf.mxu0
    %v283 = vadd.f32 0.0, %v282
    %284 = vmatmul.bf16.gmra.mxu0 %v227
    %v285 = vpop.f32.mrf.mxu0
    %v286 = vadd.f32 0.0, %v285
    %v287 = vpop.f32.mrf.mxu0
    %v288 = vadd.f32 0.0, %v287
    %289 = vmatmul.bf16.gmra.mxu0 %v230
    %v290 = vpop.f32.mrf.mxu0
    %v291 = vadd.f32 0.0, %v290
    %v292 = vpop.f32.mrf.mxu0
    %v293 = vadd.f32 0.0, %v292
    %294 = vmatmul.bf16.gmra.mxu0 %v233
    %v295 = vpop.f32.mrf.mxu0
    %v296 = vadd.f32 0.0, %v295
    %v297 = vpop.f32.mrf.mxu0
    %v298 = vadd.f32 0.0, %v297
    %299 = vmatmul.bf16.gmra.mxu0 %v236
    %v300 = vpop.f32.mrf.mxu0
    %v301 = vadd.f32 0.0, %v300
    %v302 = vpop.f32.mrf.mxu0
    %v303 = vadd.f32 0.0, %v302
    %304 = vmatmul.bf16.gmra.mxu0 %v239
    %v305 = vpop.f32.mrf.mxu0
    %v306 = vadd.f32 0.0, %v305
    %v307 = vpop.f32.mrf.mxu0
    %v308 = vadd.f32 0.0, %v307
    %309 = vmatmul.bf16.gmra.mxu0 %v242
    %v310 = vpop.f32.mrf.mxu0
    %v311 = vadd.f32 0.0, %v310
    %v312 = vpop.f32.mrf.mxu0
    %v313 = vadd.f32 0.0, %v312
    %314 = vmatmul.bf16.gmra.mxu0 %v245
    %v315 = vpop.f32.mrf.mxu0
    %v316 = vadd.f32 0.0, %v315
    %v317 = vpop.f32.mrf.mxu0
    %v318 = vadd.f32 0.0, %v317
    %319 = vdwg.mxu0
    %v336 = vunpack.c.l.b16 %v126
    %v337 = vunpack.c.l.b16 %v127
    %v338 = vunpack.c.l.b16 %v128
    %v339 = vunpack.c.l.b16 %v129
    %v340 = vunpack.c.l.b16 %v130
    %v341 = vunpack.c.l.b16 %v131
    %v342 = vunpack.c.l.b16 %v132
    %v343 = vunpack.c.l.b16 %v133
    %v344 = vunpack.c.l.b16 %v134
    %v345 = vunpack.c.l.b16 %v135
    %v346 = vunpack.c.l.b16 %v136
    %v347 = vunpack.c.l.b16 %v137
    %v348 = vunpack.c.l.b16 %v138
    %v349 = vunpack.c.l.b16 %v139
    %v350 = vunpack.c.l.b16 %v140
    %v351 = vunpack.c.l.b16 %v141
    %v352 = vpack.c.b16 %v337, %v336
    %v353 = vpack.c.b16 %v339, %v338
    %v354 = vpack.c.b16 %v341, %v340
    %v355 = vpack.c.b16 %v343, %v342
    %v356 = vpack.c.b16 %v345, %v344
    %v357 = vpack.c.b16 %v347, %v346
    %v358 = vpack.c.b16 %v349, %v348
    %v359 = vpack.c.b16 %v351, %v350
    %v361 = vsel %vm222, %v352, 0
    %v364 = vsel %vm222, %v353, 0
    %v367 = vsel %vm222, %v354, 0
    %v370 = vsel %vm222, %v355, 0
    %v373 = vsel %vm222, %v356, 0
    %v376 = vsel %vm222, %v357, 0
    %v379 = vsel %vm222, %v358, 0
    %v382 = vsel %vm222, %v359, 0
    %384 = vmatpush.bf16.xpose.msra.mxu0 %v382
    %385 = vmatpush.bf16.xpose.msra.mxu0 %v379
    %386 = vmatpush.bf16.xpose.msra.mxu0 %v376
    %387 = vmatpush.bf16.xpose.msra.mxu0 %v373
    %388 = vmatpush.bf16.xpose.msra.mxu0 %v370
    %389 = vmatpush.bf16.xpose.msra.mxu0 %v367
    %390 = vmatpush.bf16.xpose.msra.mxu0 %v364
    %391 = vmatpush.bf16.xpose.msra.mxu0 %v361
    %392 = vmatmul.bf16.gmra.mxu0 %v224
    %v393 = vpop.f32.mrf.mxu0
    %v394 = vadd.f32 %v281, %v393
    %v395 = vpop.f32.mrf.mxu0
    %v396 = vadd.f32 %v283, %v395
    %397 = vmatmul.bf16.gmra.mxu0 %v227
    %v398 = vpop.f32.mrf.mxu0
    %v399 = vadd.f32 %v286, %v398
    %v400 = vpop.f32.mrf.mxu0
    %v401 = vadd.f32 %v288, %v400
    %402 = vmatmul.bf16.gmra.mxu0 %v230
    %v403 = vpop.f32.mrf.mxu0
    %v404 = vadd.f32 %v291, %v403
    %v405 = vpop.f32.mrf.mxu0
    %v406 = vadd.f32 %v293, %v405
    %407 = vmatmul.bf16.gmra.mxu0 %v233
    %v408 = vpop.f32.mrf.mxu0
    %v409 = vadd.f32 %v296, %v408
    %v410 = vpop.f32.mrf.mxu0
    %v411 = vadd.f32 %v298, %v410
    %412 = vmatmul.bf16.gmra.mxu0 %v236
    %v413 = vpop.f32.mrf.mxu0
    %v414 = vadd.f32 %v301, %v413
    %v415 = vpop.f32.mrf.mxu0
    %v416 = vadd.f32 %v303, %v415
    %417 = vmatmul.bf16.gmra.mxu0 %v239
    %v418 = vpop.f32.mrf.mxu0
    %v419 = vadd.f32 %v306, %v418
    %v420 = vpop.f32.mrf.mxu0
    %v421 = vadd.f32 %v308, %v420
    %422 = vmatmul.bf16.gmra.mxu0 %v242
    %v423 = vpop.f32.mrf.mxu0
    %v424 = vadd.f32 %v311, %v423
    %v425 = vpop.f32.mrf.mxu0
    %v426 = vadd.f32 %v313, %v425
    %427 = vmatmul.bf16.gmra.mxu0 %v245
    %v428 = vpop.f32.mrf.mxu0
    %v429 = vadd.f32 %v316, %v428
    %v430 = vpop.f32.mrf.mxu0
    %v431 = vadd.f32 %v318, %v430
    %432 = vdwg.mxu0
    %v434 = vsel %vm222, %v118, 0
    %v437 = vsel %vm222, %v119, 0
    %v440 = vsel %vm222, %v120, 0
    %v443 = vsel %vm222, %v121, 0
    %v446 = vsel %vm222, %v122, 0
    %v449 = vsel %vm222, %v123, 0
    %v452 = vsel %vm222, %v124, 0
    %v455 = vsel %vm222, %v125, 0
    %457 = vmatpush.bf16.xpose.msra.mxu0 %v382
    %458 = vmatpush.bf16.xpose.msra.mxu0 %v379
    %459 = vmatpush.bf16.xpose.msra.mxu0 %v376
    %460 = vmatpush.bf16.xpose.msra.mxu0 %v373
    %461 = vmatpush.bf16.xpose.msra.mxu0 %v370
    %462 = vmatpush.bf16.xpose.msra.mxu0 %v367
    %463 = vmatpush.bf16.xpose.msra.mxu0 %v364
    %464 = vmatpush.bf16.xpose.msra.mxu0 %v361
    %465 = vmatmul.bf16.gmra.mxu0 %v434
    %v466 = vpop.f32.mrf.mxu0
    %v467 = vadd.f32 0.0, %v466
    %v468 = vpop.f32.mrf.mxu0
    %v469 = vadd.f32 0.0, %v468
    %470 = vmatmul.bf16.gmra.mxu0 %v437
    %v471 = vpop.f32.mrf.mxu0
    %v472 = vadd.f32 0.0, %v471
    %v473 = vpop.f32.mrf.mxu0
    %v474 = vadd.f32 0.0, %v473
    %475 = vmatmul.bf16.gmra.mxu0 %v440
    %v476 = vpop.f32.mrf.mxu0
    %v477 = vadd.f32 0.0, %v476
    %v478 = vpop.f32.mrf.mxu0
    %v479 = vadd.f32 0.0, %v478
    %480 = vmatmul.bf16.gmra.mxu0 %v443
    %v481 = vpop.f32.mrf.mxu0
    %v482 = vadd.f32 0.0, %v481
    %v483 = vpop.f32.mrf.mxu0
    %v484 = vadd.f32 0.0, %v483
    %485 = vmatmul.bf16.gmra.mxu0 %v446
    %v486 = vpop.f32.mrf.mxu0
    %v487 = vadd.f32 0.0, %v486
    %v488 = vpop.f32.mrf.mxu0
    %v489 = vadd.f32 0.0, %v488
    %490 = vmatmul.bf16.gmra.mxu0 %v449
    %v491 = vpop.f32.mrf.mxu0
    %v492 = vadd.f32 0.0, %v491
    %v493 = vpop.f32.mrf.mxu0
    %v494 = vadd.f32 0.0, %v493
    %495 = vmatmul.bf16.gmra.mxu0 %v452
    %v496 = vpop.f32.mrf.mxu0
    %v497 = vadd.f32 0.0, %v496
    %v498 = vpop.f32.mrf.mxu0
    %v499 = vadd.f32 0.0, %v498
    %500 = vmatmul.bf16.gmra.mxu0 %v455
    %v501 = vpop.f32.mrf.mxu0
    %v502 = vadd.f32 0.0, %v501
    %v503 = vpop.f32.mrf.mxu0
    %v504 = vadd.f32 0.0, %v503
    %505 = vdwg.mxu0
    %v506 = vadd.f32 %v394, %v467
    %v507 = vadd.f32 %v396, %v469
    %v508 = vadd.f32 %v399, %v472
    %v509 = vadd.f32 %v401, %v474
    %v510 = vadd.f32 %v404, %v477
    %v511 = vadd.f32 %v406, %v479
    %v512 = vadd.f32 %v409, %v482
    %v513 = vadd.f32 %v411, %v484
    %v514 = vadd.f32 %v414, %v487
    %v515 = vadd.f32 %v416, %v489
    %v516 = vadd.f32 %v419, %v492
    %v517 = vadd.f32 %v421, %v494
    %v518 = vadd.f32 %v424, %v497
    %v519 = vadd.f32 %v426, %v499
    %v520 = vadd.f32 %v429, %v502
    %v521 = vadd.f32 %v431, %v504
    %v522 = vld [vmem:[%s2] sm:$0xff]
    %v523 = vld [vmem:[%s2 + $0x8] sm:$0xff]
    %v524 = vld [vmem:[%s2 + $0x10] sm:$0xff]
    %v525 = vld [vmem:[%s2 + $0x18] sm:$0xff]
    %v526 = vld [vmem:[%s2 + $0x20] sm:$0xff]
    %v527 = vld [vmem:[%s2 + $0x28] sm:$0xff]
    %v528 = vld [vmem:[%s2 + $0x30] sm:$0xff]
    %v529 = vld [vmem:[%s2 + $0x38] sm:$0xff]
    %v530 = vld [vmem:[%s2 + $0x40] sm:$0xff]
    %v531 = vld [vmem:[%s2 + $0x48] sm:$0xff]
    %v532 = vld [vmem:[%s2 + $0x50] sm:$0xff]
    %v533 = vld [vmem:[%s2 + $0x58] sm:$0xff]
    %v534 = vld [vmem:[%s2 + $0x60] sm:$0xff]
    %v535 = vld [vmem:[%s2 + $0x68] sm:$0xff]
    %v536 = vld [vmem:[%s2 + $0x70] sm:$0xff]
    %v537 = vld [vmem:[%s2 + $0x78] sm:$0xff]
    %v538 = vld [vmem:[%s3] sm:$0x1]
    %540 = vset.pattern.permute.xlu0 0
    %541 = vperm.xlu0 %540, %v522
    %v542 = vpop.permute.xlu0 %541
    %545 = vset.pattern.permute.xlu0 0
    %546 = vperm.xlu0 %545, %v523
    %v547 = vpop.permute.xlu0 %546
    %550 = vset.pattern.permute.xlu0 0
    %551 = vperm.xlu0 %550, %v524
    %v552 = vpop.permute.xlu0 %551
    %555 = vset.pattern.permute.xlu0 0
    %556 = vperm.xlu0 %555, %v525
    %v557 = vpop.permute.xlu0 %556
    %560 = vset.pattern.permute.xlu0 0
    %561 = vperm.xlu0 %560, %v526
    %v562 = vpop.permute.xlu0 %561
    %565 = vset.pattern.permute.xlu0 0
    %566 = vperm.xlu0 %565, %v527
    %v567 = vpop.permute.xlu0 %566
    %570 = vset.pattern.permute.xlu0 0
    %571 = vperm.xlu0 %570, %v528
    %v572 = vpop.permute.xlu0 %571
    %575 = vset.pattern.permute.xlu0 0
    %576 = vperm.xlu0 %575, %v529
    %v577 = vpop.permute.xlu0 %576
    %580 = vset.pattern.permute.xlu0 0
    %581 = vperm.xlu0 %580, %v530
    %v582 = vpop.permute.xlu0 %581
    %585 = vset.pattern.permute.xlu0 0
    %586 = vperm.xlu0 %585, %v531
    %v587 = vpop.permute.xlu0 %586
    %590 = vset.pattern.permute.xlu0 0
    %591 = vperm.xlu0 %590, %v532
    %v592 = vpop.permute.xlu0 %591
    %595 = vset.pattern.permute.xlu0 0
    %596 = vperm.xlu0 %595, %v533
    %v597 = vpop.permute.xlu0 %596
    %600 = vset.pattern.permute.xlu0 0
    %601 = vperm.xlu0 %600, %v534
    %v602 = vpop.permute.xlu0 %601
    %605 = vset.pattern.permute.xlu0 0
    %606 = vperm.xlu0 %605, %v535
    %v607 = vpop.permute.xlu0 %606
    %610 = vset.pattern.permute.xlu0 0
    %611 = vperm.xlu0 %610, %v536
    %v612 = vpop.permute.xlu0 %611
    %615 = vset.pattern.permute.xlu0 0
    %616 = vperm.xlu0 %615, %v537
    %v617 = vpop.permute.xlu0 %616
    %v620 = vperm.slane %v538, 0
    %v622 = vadd.f32 %v542, %v620
    %v623 = vadd.f32 %v547, %v620
    %v624 = vadd.f32 %v552, %v620
    %v625 = vadd.f32 %v557, %v620
    %v626 = vadd.f32 %v562, %v620
    %v627 = vadd.f32 %v567, %v620
    %v628 = vadd.f32 %v572, %v620
    %v629 = vadd.f32 %v577, %v620
    %v630 = vadd.f32 %v582, %v620
    %v631 = vadd.f32 %v587, %v620
    %v632 = vadd.f32 %v592, %v620
    %v633 = vadd.f32 %v597, %v620
    %v634 = vadd.f32 %v602, %v620
    %v635 = vadd.f32 %v607, %v620
    %v636 = vadd.f32 %v612, %v620
    %v637 = vadd.f32 %v617, %v620
    %v638 = vmul.f32 %v506, 2.0
    %v639 = vmul.f32 %v507, 2.0
    %v640 = vmul.f32 %v508, 2.0
    %v641 = vmul.f32 %v509, 2.0
    %v642 = vmul.f32 %v510, 2.0
    %v643 = vmul.f32 %v511, 2.0
    %v644 = vmul.f32 %v512, 2.0
    %v645 = vmul.f32 %v513, 2.0
    %v646 = vmul.f32 %v514, 2.0
    %v647 = vmul.f32 %v515, 2.0
    %v648 = vmul.f32 %v516, 2.0
    %v649 = vmul.f32 %v517, 2.0
    %v650 = vmul.f32 %v518, 2.0
    %v651 = vmul.f32 %v519, 2.0
    %v652 = vmul.f32 %v520, 2.0
    %v653 = vmul.f32 %v521, 2.0
    %v654 = vsub.f32 %v622, %v638
    %v655 = vsub.f32 %v623, %v639
    %v656 = vsub.f32 %v624, %v640
    %v657 = vsub.f32 %v625, %v641
    %v658 = vsub.f32 %v626, %v642
    %v659 = vsub.f32 %v627, %v643
    %v660 = vsub.f32 %v628, %v644
    %v661 = vsub.f32 %v629, %v645
    %v662 = vsub.f32 %v630, %v646
    %v663 = vsub.f32 %v631, %v647
    %v664 = vsub.f32 %v632, %v648
    %v665 = vsub.f32 %v633, %v649
    %v666 = vsub.f32 %v634, %v650
    %v667 = vsub.f32 %v635, %v651
    %v668 = vsub.f32 %v636, %v652
    %v669 = vsub.f32 %v637, %v653
    %v670 = vmax.f32 %v654, 0.0
    %v671 = vmax.f32 %v655, 0.0
    %v672 = vmax.f32 %v656, 0.0
    %v673 = vmax.f32 %v657, 0.0
    %v674 = vmax.f32 %v658, 0.0
    %v675 = vmax.f32 %v659, 0.0
    %v676 = vmax.f32 %v660, 0.0
    %v677 = vmax.f32 %v661, 0.0
    %v678 = vmax.f32 %v662, 0.0
    %v679 = vmax.f32 %v663, 0.0
    %v680 = vmax.f32 %v664, 0.0
    %v681 = vmax.f32 %v665, 0.0
    %v682 = vmax.f32 %v666, 0.0
    %v683 = vmax.f32 %v667, 0.0
    %v684 = vmax.f32 %v668, 0.0
    %v685 = vmax.f32 %v669, 0.0
    %s686 = smul.u32 0, 128
    %v687 = vlaneseq
    %v688 = vshrl.u32 %v687, 7
    %v689 = vadd.s32 %v688, 8
    %v690 = vadd.s32 %v688, 16
    %v691 = vadd.s32 %v688, 24
    %v692 = vadd.s32 %v688, 32
    %v693 = vadd.s32 %v688, 40
    %v694 = vadd.s32 %v688, 48
    %v695 = vadd.s32 %v688, 56
    %v696 = vadd.s32 %v688, 64
    %v697 = vadd.s32 %v688, 72
    %v698 = vadd.s32 %v688, 80
    %v699 = vadd.s32 %v688, 88
    %v700 = vadd.s32 %v688, 96
    %v701 = vadd.s32 %v688, 104
    %v702 = vadd.s32 %v688, 112
    %v703 = vadd.s32 %v688, 120
    %v704 = vstv %s686
    %v705 = vadd.s32 %v704, %v688
    %v706 = vadd.s32 %v704, %v689
    %v707 = vadd.s32 %v704, %v690
    %v708 = vadd.s32 %v704, %v691
    %v709 = vadd.s32 %v704, %v692
    %v710 = vadd.s32 %v704, %v693
    %v711 = vadd.s32 %v704, %v694
    %v712 = vadd.s32 %v704, %v695
    %v713 = vadd.s32 %v704, %v696
    %v714 = vadd.s32 %v704, %v697
    %v715 = vadd.s32 %v704, %v698
    %v716 = vadd.s32 %v704, %v699
    %v717 = vadd.s32 %v704, %v700
    %v718 = vadd.s32 %v704, %v701
    %v719 = vadd.s32 %v704, %v702
    %v720 = vadd.s32 %v704, %v703
    %s721 = smul.u32 0, 128
    %v722 = vlaneseq
    %v723 = vand.u32 %v722, 127
    %v724 = vstv %s721
    %v725 = vadd.s32 %v724, %v723
    %vm726 = vcmp.eq.s32.totalorder %v705, %v725
    %vm727 = vcmp.eq.s32.totalorder %v706, %v725
    %vm728 = vcmp.eq.s32.totalorder %v707, %v725
    %vm729 = vcmp.eq.s32.totalorder %v708, %v725
    %vm730 = vcmp.eq.s32.totalorder %v709, %v725
    %vm731 = vcmp.eq.s32.totalorder %v710, %v725
    %vm732 = vcmp.eq.s32.totalorder %v711, %v725
    %vm733 = vcmp.eq.s32.totalorder %v712, %v725
    %vm734 = vcmp.eq.s32.totalorder %v713, %v725
    %vm735 = vcmp.eq.s32.totalorder %v714, %v725
    %vm736 = vcmp.eq.s32.totalorder %v715, %v725
    %vm737 = vcmp.eq.s32.totalorder %v716, %v725
    %vm738 = vcmp.eq.s32.totalorder %v717, %v725
    %vm739 = vcmp.eq.s32.totalorder %v718, %v725
    %vm740 = vcmp.eq.s32.totalorder %v719, %v725
    %vm741 = vcmp.eq.s32.totalorder %v720, %v725
    %v742 = vsel %vm726, 0.0, %v670
    %v743 = vsel %vm727, 0.0, %v671
    %v744 = vsel %vm728, 0.0, %v672
    %v745 = vsel %vm729, 0.0, %v673
    %v746 = vsel %vm730, 0.0, %v674
    %v747 = vsel %vm731, 0.0, %v675
    %v748 = vsel %vm732, 0.0, %v676
    %v749 = vsel %vm733, 0.0, %v677
    %v750 = vsel %vm734, 0.0, %v678
    %v751 = vsel %vm735, 0.0, %v679
    %v752 = vsel %vm736, 0.0, %v680
    %v753 = vsel %vm737, 0.0, %v681
    %v754 = vsel %vm738, 0.0, %v682
    %v755 = vsel %vm739, 0.0, %v683
    %v756 = vsel %vm740, 0.0, %v684
    %v757 = vsel %vm741, 0.0, %v685
    %v758 = vrsqrt.pop %v742
    %v759 = vmul.f32 %v758, %v742
    %v760 = vmul.f32 %v759, %v758
    %v761 = vmul.f32 0.5, %v760
    %v762 = vsub.f32 1.5, %v761
    %v763 = vmul.f32 %v758, %v762
    %v764 = vmul.f32 %v742, %v763
    %vm765 = vcmp.eq.f32.partialorder %v742, inf
    %v766 = vsel %vm765, %v742, %v764
    %vm767 = vcmp.eq.f32.partialorder %v742, 0.0
    %v768 = vand.u32 %v742, 2147483648
    %v769 = vsel %vm767, %v768, %v766
    %v770 = vrsqrt.pop %v743
    %v771 = vmul.f32 %v770, %v743
    %v772 = vmul.f32 %v771, %v770
    %v773 = vmul.f32 0.5, %v772
    %v774 = vsub.f32 1.5, %v773
    %v775 = vmul.f32 %v770, %v774
    %v776 = vmul.f32 %v743, %v775
    %vm777 = vcmp.eq.f32.partialorder %v743, inf
    %v778 = vsel %vm777, %v743, %v776
    %vm779 = vcmp.eq.f32.partialorder %v743, 0.0
    %v780 = vand.u32 %v743, 2147483648
    %v781 = vsel %vm779, %v780, %v778
    %v782 = vrsqrt.pop %v744
    %v783 = vmul.f32 %v782, %v744
    %v784 = vmul.f32 %v783, %v782
    %v785 = vmul.f32 0.5, %v784
    %v786 = vsub.f32 1.5, %v785
    %v787 = vmul.f32 %v782, %v786
    %v788 = vmul.f32 %v744, %v787
    %vm789 = vcmp.eq.f32.partialorder %v744, inf
    %v790 = vsel %vm789, %v744, %v788
    %vm791 = vcmp.eq.f32.partialorder %v744, 0.0
    %v792 = vand.u32 %v744, 2147483648
    %v793 = vsel %vm791, %v792, %v790
    %v794 = vrsqrt.pop %v745
    %v795 = vmul.f32 %v794, %v745
    %v796 = vmul.f32 %v795, %v794
    %v797 = vmul.f32 0.5, %v796
    %v798 = vsub.f32 1.5, %v797
    %v799 = vmul.f32 %v794, %v798
    %v800 = vmul.f32 %v745, %v799
    %vm801 = vcmp.eq.f32.partialorder %v745, inf
    %v802 = vsel %vm801, %v745, %v800
    %vm803 = vcmp.eq.f32.partialorder %v745, 0.0
    %v804 = vand.u32 %v745, 2147483648
    %v805 = vsel %vm803, %v804, %v802
    %v806 = vrsqrt.pop %v746
    %v807 = vmul.f32 %v806, %v746
    %v808 = vmul.f32 %v807, %v806
    %v809 = vmul.f32 0.5, %v808
    %v810 = vsub.f32 1.5, %v809
    %v811 = vmul.f32 %v806, %v810
    %v812 = vmul.f32 %v746, %v811
    %vm813 = vcmp.eq.f32.partialorder %v746, inf
    %v814 = vsel %vm813, %v746, %v812
    %vm815 = vcmp.eq.f32.partialorder %v746, 0.0
    %v816 = vand.u32 %v746, 2147483648
    %v817 = vsel %vm815, %v816, %v814
    %v818 = vrsqrt.pop %v747
    %v819 = vmul.f32 %v818, %v747
    %v820 = vmul.f32 %v819, %v818
    %v821 = vmul.f32 0.5, %v820
    %v822 = vsub.f32 1.5, %v821
    %v823 = vmul.f32 %v818, %v822
    %v824 = vmul.f32 %v747, %v823
    %vm825 = vcmp.eq.f32.partialorder %v747, inf
    %v826 = vsel %vm825, %v747, %v824
    %vm827 = vcmp.eq.f32.partialorder %v747, 0.0
    %v828 = vand.u32 %v747, 2147483648
    %v829 = vsel %vm827, %v828, %v826
    %v830 = vrsqrt.pop %v748
    %v831 = vmul.f32 %v830, %v748
    %v832 = vmul.f32 %v831, %v830
    %v833 = vmul.f32 0.5, %v832
    %v834 = vsub.f32 1.5, %v833
    %v835 = vmul.f32 %v830, %v834
    %v836 = vmul.f32 %v748, %v835
    %vm837 = vcmp.eq.f32.partialorder %v748, inf
    %v838 = vsel %vm837, %v748, %v836
    %vm839 = vcmp.eq.f32.partialorder %v748, 0.0
    %v840 = vand.u32 %v748, 2147483648
    %v841 = vsel %vm839, %v840, %v838
    %v842 = vrsqrt.pop %v749
    %v843 = vmul.f32 %v842, %v749
    %v844 = vmul.f32 %v843, %v842
    %v845 = vmul.f32 0.5, %v844
    %v846 = vsub.f32 1.5, %v845
    %v847 = vmul.f32 %v842, %v846
    %v848 = vmul.f32 %v749, %v847
    %vm849 = vcmp.eq.f32.partialorder %v749, inf
    %v850 = vsel %vm849, %v749, %v848
    %vm851 = vcmp.eq.f32.partialorder %v749, 0.0
    %v852 = vand.u32 %v749, 2147483648
    %v853 = vsel %vm851, %v852, %v850
    %v854 = vrsqrt.pop %v750
    %v855 = vmul.f32 %v854, %v750
    %v856 = vmul.f32 %v855, %v854
    %v857 = vmul.f32 0.5, %v856
    %v858 = vsub.f32 1.5, %v857
    %v859 = vmul.f32 %v854, %v858
    %v860 = vmul.f32 %v750, %v859
    %vm861 = vcmp.eq.f32.partialorder %v750, inf
    %v862 = vsel %vm861, %v750, %v860
    %vm863 = vcmp.eq.f32.partialorder %v750, 0.0
    %v864 = vand.u32 %v750, 2147483648
    %v865 = vsel %vm863, %v864, %v862
    %v866 = vrsqrt.pop %v751
    %v867 = vmul.f32 %v866, %v751
    %v868 = vmul.f32 %v867, %v866
    %v869 = vmul.f32 0.5, %v868
    %v870 = vsub.f32 1.5, %v869
    %v871 = vmul.f32 %v866, %v870
    %v872 = vmul.f32 %v751, %v871
    %vm873 = vcmp.eq.f32.partialorder %v751, inf
    %v874 = vsel %vm873, %v751, %v872
    %vm875 = vcmp.eq.f32.partialorder %v751, 0.0
    %v876 = vand.u32 %v751, 2147483648
    %v877 = vsel %vm875, %v876, %v874
    %v878 = vrsqrt.pop %v752
    %v879 = vmul.f32 %v878, %v752
    %v880 = vmul.f32 %v879, %v878
    %v881 = vmul.f32 0.5, %v880
    %v882 = vsub.f32 1.5, %v881
    %v883 = vmul.f32 %v878, %v882
    %v884 = vmul.f32 %v752, %v883
    %vm885 = vcmp.eq.f32.partialorder %v752, inf
    %v886 = vsel %vm885, %v752, %v884
    %vm887 = vcmp.eq.f32.partialorder %v752, 0.0
    %v888 = vand.u32 %v752, 2147483648
    %v889 = vsel %vm887, %v888, %v886
    %v890 = vrsqrt.pop %v753
    %v891 = vmul.f32 %v890, %v753
    %v892 = vmul.f32 %v891, %v890
    %v893 = vmul.f32 0.5, %v892
    %v894 = vsub.f32 1.5, %v893
    %v895 = vmul.f32 %v890, %v894
    %v896 = vmul.f32 %v753, %v895
    %vm897 = vcmp.eq.f32.partialorder %v753, inf
    %v898 = vsel %vm897, %v753, %v896
    %vm899 = vcmp.eq.f32.partialorder %v753, 0.0
    %v900 = vand.u32 %v753, 2147483648
    %v901 = vsel %vm899, %v900, %v898
    %v902 = vrsqrt.pop %v754
    %v903 = vmul.f32 %v902, %v754
    %v904 = vmul.f32 %v903, %v902
    %v905 = vmul.f32 0.5, %v904
    %v906 = vsub.f32 1.5, %v905
    %v907 = vmul.f32 %v902, %v906
    %v908 = vmul.f32 %v754, %v907
    %vm909 = vcmp.eq.f32.partialorder %v754, inf
    %v910 = vsel %vm909, %v754, %v908
    %vm911 = vcmp.eq.f32.partialorder %v754, 0.0
    %v912 = vand.u32 %v754, 2147483648
    %v913 = vsel %vm911, %v912, %v910
    %v914 = vrsqrt.pop %v755
    %v915 = vmul.f32 %v914, %v755
    %v916 = vmul.f32 %v915, %v914
    %v917 = vmul.f32 0.5, %v916
    %v918 = vsub.f32 1.5, %v917
    %v919 = vmul.f32 %v914, %v918
    %v920 = vmul.f32 %v755, %v919
    %vm921 = vcmp.eq.f32.partialorder %v755, inf
    %v922 = vsel %vm921, %v755, %v920
    %vm923 = vcmp.eq.f32.partialorder %v755, 0.0
    %v924 = vand.u32 %v755, 2147483648
    %v925 = vsel %vm923, %v924, %v922
    %v926 = vrsqrt.pop %v756
    %v927 = vmul.f32 %v926, %v756
    %v928 = vmul.f32 %v927, %v926
    %v929 = vmul.f32 0.5, %v928
    %v930 = vsub.f32 1.5, %v929
    %v931 = vmul.f32 %v926, %v930
    %v932 = vmul.f32 %v756, %v931
    %vm933 = vcmp.eq.f32.partialorder %v756, inf
    %v934 = vsel %vm933, %v756, %v932
    %vm935 = vcmp.eq.f32.partialorder %v756, 0.0
    %v936 = vand.u32 %v756, 2147483648
    %v937 = vsel %vm935, %v936, %v934
    %v938 = vrsqrt.pop %v757
    %v939 = vmul.f32 %v938, %v757
    %v940 = vmul.f32 %v939, %v938
    %v941 = vmul.f32 0.5, %v940
    %v942 = vsub.f32 1.5, %v941
    %v943 = vmul.f32 %v938, %v942
    %v944 = vmul.f32 %v757, %v943
    %vm945 = vcmp.eq.f32.partialorder %v757, inf
    %v946 = vsel %vm945, %v757, %v944
    %vm947 = vcmp.eq.f32.partialorder %v757, 0.0
    %v948 = vand.u32 %v757, 2147483648
    %v949 = vsel %vm947, %v948, %v946
    %v950 = vsub.f32 0.0, %v769
    %v951 = vsub.f32 0.0, %v781
    %v952 = vsub.f32 0.0, %v793
    %v953 = vsub.f32 0.0, %v805
    %v954 = vsub.f32 0.0, %v817
    %v955 = vsub.f32 0.0, %v829
    %v956 = vsub.f32 0.0, %v841
    %v957 = vsub.f32 0.0, %v853
    %v958 = vsub.f32 0.0, %v865
    %v959 = vsub.f32 0.0, %v877
    %v960 = vsub.f32 0.0, %v889
    %v961 = vsub.f32 0.0, %v901
    %v962 = vsub.f32 0.0, %v913
    %v963 = vsub.f32 0.0, %v925
    %v964 = vsub.f32 0.0, %v937
    %v965 = vsub.f32 0.0, %v949
    %v966 = vmul.f32 %v950, 2.0
    %v967 = vmul.f32 %v951, 2.0
    %v968 = vmul.f32 %v952, 2.0
    %v969 = vmul.f32 %v953, 2.0
    %v970 = vmul.f32 %v954, 2.0
    %v971 = vmul.f32 %v955, 2.0
    %v972 = vmul.f32 %v956, 2.0
    %v973 = vmul.f32 %v957, 2.0
    %v974 = vmul.f32 %v958, 2.0
    %v975 = vmul.f32 %v959, 2.0
    %v976 = vmul.f32 %v960, 2.0
    %v977 = vmul.f32 %v961, 2.0
    %v978 = vmul.f32 %v962, 2.0
    %v979 = vmul.f32 %v963, 2.0
    %v980 = vmul.f32 %v964, 2.0
    %v981 = vmul.f32 %v965, 2.0
    %v982 = vmul.f32 %v966, 1.442695
    %v983 = vpow.pop %v982
    %v984 = vmul.f32 %v967, 1.442695
    %v985 = vpow.pop %v984
    %v986 = vmul.f32 %v968, 1.442695
    %v987 = vpow.pop %v986
    %v988 = vmul.f32 %v969, 1.442695
    %v989 = vpow.pop %v988
    %v990 = vmul.f32 %v970, 1.442695
    %v991 = vpow.pop %v990
    %v992 = vmul.f32 %v971, 1.442695
    %v993 = vpow.pop %v992
    %v994 = vmul.f32 %v972, 1.442695
    %v995 = vpow.pop %v994
    %v996 = vmul.f32 %v973, 1.442695
    %v997 = vpow.pop %v996
    %v998 = vmul.f32 %v974, 1.442695
    %v999 = vpow.pop %v998
    %v1000 = vmul.f32 %v975, 1.442695
    %v1001 = vpow.pop %v1000
    %v1002 = vmul.f32 %v976, 1.442695
    %v1003 = vpow.pop %v1002
    %v1004 = vmul.f32 %v977, 1.442695
    %v1005 = vpow.pop %v1004
    %v1006 = vmul.f32 %v978, 1.442695
    %v1007 = vpow.pop %v1006
    %v1008 = vmul.f32 %v979, 1.442695
    %v1009 = vpow.pop %v1008
    %v1010 = vmul.f32 %v980, 1.442695
    %v1011 = vpow.pop %v1010
    %v1012 = vmul.f32 %v981, 1.442695
    %v1013 = vpow.pop %v1012
    %v1014 = vld [vmem:[#allocation2] sm:$0xff]
    %v1015 = vld [vmem:[#allocation2 + $0x8] sm:$0xff]
    %v1016 = vld [vmem:[#allocation2 + $0x10] sm:$0xff]
    %v1017 = vld [vmem:[#allocation2 + $0x18] sm:$0xff]
    %v1018 = vld [vmem:[#allocation2 + $0x20] sm:$0xff]
    %v1019 = vld [vmem:[#allocation2 + $0x28] sm:$0xff]
    %v1020 = vld [vmem:[#allocation2 + $0x30] sm:$0xff]
    %v1021 = vld [vmem:[#allocation2 + $0x38] sm:$0xff]
    %v1022 = vld [vmem:[#allocation2 + $0x40] sm:$0xff]
    %v1023 = vld [vmem:[#allocation2 + $0x48] sm:$0xff]
    %v1024 = vld [vmem:[#allocation2 + $0x50] sm:$0xff]
    %v1025 = vld [vmem:[#allocation2 + $0x58] sm:$0xff]
    %v1026 = vld [vmem:[#allocation2 + $0x60] sm:$0xff]
    %v1027 = vld [vmem:[#allocation2 + $0x68] sm:$0xff]
    %v1028 = vld [vmem:[#allocation2 + $0x70] sm:$0xff]
    %v1029 = vld [vmem:[#allocation2 + $0x78] sm:$0xff]
    %v1030 = vadd.f32 %v1014, %v983
    %v1031 = vadd.f32 %v1015, %v985
    %v1032 = vadd.f32 %v1016, %v987
    %v1033 = vadd.f32 %v1017, %v989
    %v1034 = vadd.f32 %v1018, %v991
    %v1035 = vadd.f32 %v1019, %v993
    %v1036 = vadd.f32 %v1020, %v995
    %v1037 = vadd.f32 %v1021, %v997
    %v1038 = vadd.f32 %v1022, %v999
    %v1039 = vadd.f32 %v1023, %v1001
    %v1040 = vadd.f32 %v1024, %v1003
    %v1041 = vadd.f32 %v1025, %v1005
    %v1042 = vadd.f32 %v1026, %v1007
    %v1043 = vadd.f32 %v1027, %v1009
    %v1044 = vadd.f32 %v1028, %v1011
    %v1045 = vadd.f32 %v1029, %v1013
    %1046 = vst [vmem:[#allocation2] sm:$0xff] %v1030
    %1047 = vst [vmem:[#allocation2 + $0x8] sm:$0xff] %v1031
    %1048 = vst [vmem:[#allocation2 + $0x10] sm:$0xff] %v1032
    %1049 = vst [vmem:[#allocation2 + $0x18] sm:$0xff] %v1033
    %1050 = vst [vmem:[#allocation2 + $0x20] sm:$0xff] %v1034
    %1051 = vst [vmem:[#allocation2 + $0x28] sm:$0xff] %v1035
    %1052 = vst [vmem:[#allocation2 + $0x30] sm:$0xff] %v1036
    %1053 = vst [vmem:[#allocation2 + $0x38] sm:$0xff] %v1037
    %1054 = vst [vmem:[#allocation2 + $0x40] sm:$0xff] %v1038
    %1055 = vst [vmem:[#allocation2 + $0x48] sm:$0xff] %v1039
    %1056 = vst [vmem:[#allocation2 + $0x50] sm:$0xff] %v1040
    %1057 = vst [vmem:[#allocation2 + $0x58] sm:$0xff] %v1041
    %1058 = vst [vmem:[#allocation2 + $0x60] sm:$0xff] %v1042
    %1059 = vst [vmem:[#allocation2 + $0x68] sm:$0xff] %v1043
    %1060 = vst [vmem:[#allocation2 + $0x70] sm:$0xff] %v1044
    %1061 = vst [vmem:[#allocation2 + $0x78] sm:$0xff] %v1045
    // Predicated region
    $region22: #{tpu_custom_call.1} parent=1 // pred_check
      _
    $region23: #{tpu_custom_call.1} parent=1 // pred_check_branch
      %1063 = sbr.rel (0) target = $region25
    $region24: #{tpu_custom_call.1} parent=1 // pred_region
      %1065 = vsyncadd [#allocation3], 0
      %s1066 = sshll.u32 [#allocation2], 4
      %s1067 = int_to_ptr.vmem [resolvable:$true] %s1066
      %s1068 = sshll.u32 %s4, 4
      %s1069 = int_to_ptr.hbm [resolvable:$true] %s1068
      %1074 = dma.vmem_to_hbm [thread:$0]  %s1067, 2048, %s1069, [#allocation3], 128, 128, 8
    $region25: #{tpu_custom_call.1} parent=1 // pred_fallthru
      _
    // Predicated region
    $region26: #{tpu_custom_call.1} parent=1 // pred_check
      _
    $region27: #{tpu_custom_call.1} parent=1 // pred_check_branch
      %1076 = sbr.rel (0) target = $region29
    $region28: #{tpu_custom_call.1} parent=1 // pred_region
      %1078 = dma.done [#allocation3], 2048
    $region29: #{tpu_custom_call.1} parent=1 // pred_fallthru
      _
    %1079 = vsyncpa [#allocation3], 1

</llo_original>
